<compile_context>
chip_gen: v7x
topology: tpu7x:2x2x1
jax: 0.10.0
libtpu: 0.0.40
codegen_flags: <defaults>
</compile_context>

<pallas_src>
import functools

import jax
import jax.numpy as jnp
import numpy as np
from jax.experimental import pallas as pl
from jax.experimental.pallas import tpu as pltpu


def _conv_swish_kernel(x_ref, w_ref, o_ref, p_ref, *, n_blk, cout, H, W):
    """Fused Conv2d((3,1), pad=1, no bias) + x*sigmoid(x) for one batch block.

    x_ref: (n_blk*Cin, H*W)            raw (unpadded) input, spatial flattened on lanes
    w_ref: (3*n_blk*Cout, n_blk*Cin)   block-diag-by-image LHS, taps stacked on rows
    o_ref: (n_blk*Cout, H*(W+2))       output in the W-padded flat layout
    p_ref: (3*n_blk*Cout, H*W)         f32 scratch holding all per-tap MXU products
    """
    G = n_blk * cout
    Wp = W + 2

    # (1) One fused MXU matmul: every tap of every image in the block; the big
    #     RHS streams through the MXU exactly once.
    p_ref[...] = jnp.dot(w_ref[...], x_ref[...], preferred_element_type=jnp.float32)

    # (2) Dense zero fill of the output block: makes the two W-halo columns of
    #     every row exactly 0 (matching the reference, since swish(0) == 0).
    o_ref[...] = jnp.zeros_like(o_ref)

    # (3) Row epilogue: sum the 3 H-taps (output row h uses input rows h-1,h,h+1;
    #     out-of-range taps are dropped == zero padding), apply x*sigmoid(x),
    #     and store into the interior lanes of the W-padded output row.  All
    #     offsets are static; live values per iteration are a few vregs, so the
    #     static unroll does not blow up register pressure.
    for h in range(H):
        v = p_ref[G:2 * G, h * W:(h + 1) * W]                      # tap kh=1 (row h)
        if h > 0:
            v = v + p_ref[0:G, (h - 1) * W:h * W]                  # tap kh=0 (row h-1)
        if h + 1 < H:
            v = v + p_ref[2 * G:3 * G, (h + 1) * W:(h + 2) * W]    # tap kh=2 (row h+1)
        o_ref[:, h * Wp + 1:h * Wp + 1 + W] = (v * jax.nn.sigmoid(v)).astype(o_ref.dtype)


def _tile_bytes(n_blk, cin, cout, L, L_out, itemsize=4):
    """VMEM footprint of one grid step (double-buffered in/out/w + f32 scratch)."""
    g = n_blk * cout
    nc = n_blk * cin
    in_tile = nc * L * itemsize
    out_tile = g * L_out * itemsize
    w_tile = 3 * g * nc * itemsize
    scratch = 3 * g * L * 4
    return 2 * (in_tile + out_tile + w_tile) + scratch


def _pick_n_blk(N, cin, cout, L, L_out, budget_bytes=10 << 20):
    """VMEM-aware batch-block size; prefers >=2 grid steps (pipeline + v7x's 2 TCs)."""
    def block_ok(c):
        # (8,128) rule on the 2-D dense blocks: sublane dim multiple of 8, or full.
        return ((c * cin) % 8 == 0 or c == N) and ((c * cout) % 8 == 0 or c == N)

    divisors = [c for c in range(1, N + 1) if N % c == 0]
    valid = [c for c in divisors
             if block_ok(c) and _tile_bytes(c, cin, cout, L, L_out) <= budget_bytes]
    if not valid:
        # TODO(synk): fall back to an H-chunked grid (2-row halo) if even one
        # image per block misses the per-generation VMEM budget.
        return N
    multi = [c for c in valid if N // c >= 2]
    return max(multi if multi else valid)


def conv_swish(x, w, *, n_blk=None):
    """x: (N, Cin, H, W) f32; w: (Cout, Cin, 3, 1) f32 -> (N, Cout, H, W+2)."""
    N, Cin, H, W = x.shape
    Cout, Cin_w, KH, KW = w.shape
    assert Cin == Cin_w and KH == 3 and KW == 1
    Wp = W + 2
    L = H * W                      # flattened input spatial (lane axis)
    L_out = H * Wp                 # flattened padded output spatial (lane axis)

    if n_blk is None:
        n_blk = _pick_n_blk(N, Cin, Cout, L, L_out)
    assert N % n_blk == 0
    G = n_blk * Cout
    NC = n_blk * Cin

    # Free metadata view (NCHW is contiguous): no HBM pre-pass.
    x2 = x.reshape(N * Cin, L)

    # Block-diagonal-by-image LHS with the KH taps stacked on rows:
    #   w_bd[k*G + b*Cout + c, b*Cin + i] = w[c, i, k, 0]
    # Tiny (<= 96x80 f32), built once in the wrapper.
    w_t = jnp.transpose(w[:, :, :, 0], (2, 0, 1))                  # (KH, Cout, Cin)
    eye = jnp.eye(n_blk, dtype=w.dtype)
    w_bd = (w_t[:, None, :, None, :] * eye[None, :, None, :, None]).reshape(KH * G, NC)

    kernel = functools.partial(_conv_swish_kernel, n_blk=n_blk, cout=Cout, H=H, W=W)

    need = _tile_bytes(n_blk, Cin, Cout, L, L_out, x.dtype.itemsize)
    vmem_limit = int(min(max(need + (8 << 20), 16 << 20), 48 << 20))

    cost = pl.CostEstimate(
        flops=2 * N * Cout * KH * Cin * H * W,
        transcendentals=N * Cout * H * W,
        bytes_accessed=(x.size * x.dtype.itemsize
                        + w_bd.size * w_bd.dtype.itemsize
                        + N * Cout * L_out * x.dtype.itemsize))

    out_flat = pl.pallas_call(
        kernel,
        out_shape=jax.ShapeDtypeStruct((N * Cout, L_out), x.dtype),
        grid=(N // n_blk,),
        in_specs=[
            pl.BlockSpec((NC, L), lambda i: (i, 0)),          # dense (batch*Cin, H*W)
            pl.BlockSpec((KH * G, NC), lambda i: (0, 0)),     # tiny weight, resident
        ],
        out_specs=pl.BlockSpec((G, L_out), lambda i: (i, 0)),  # dense (batch*Cout, H*Wp)
        scratch_shapes=[pltpu.VMEM((KH * G, L), jnp.float32)],
        compiler_params=pltpu.CompilerParams(
            dimension_semantics=("parallel",),
            vmem_limit_bytes=vmem_limit),
        cost_estimate=cost,
    )(x2, w_bd)

    # Free view: (N*Cout, H*Wp) -> (N, Cout, H, W+2) == PyTorch output layout.
    return out_flat.reshape(N, Cout, H, Wp)


if __name__ == "__main__":
    key = jax.random.PRNGKey(0)
    kx, kw = jax.random.split(key)

    # Small shapes consistent with the module: Cin=10 / Cout=4 / (3,1) kernel
    # are fixed by the conv; batch=8, spatial=16 keeps the demo small while
    # exercising a multi-step grid (n_blk=4 -> grid=(2,)).
    N, Cin, H, W = 8, 10, 16, 16
    Cout, KH, KW = 4, 3, 1

    x1 = jax.random.normal(kx, (N, Cin, H, W), dtype=jnp.float32)
    fan_in = Cin * KH * KW
    weight = jax.random.normal(kw, (Cout, Cin, KH, KW), dtype=jnp.float32) / np.sqrt(fan_in)

    out = jax.block_until_ready(conv_swish(x1, weight))

    # Pure-JAX reference.
    v1 = jax.lax.conv_general_dilated(
        x1, weight, window_strides=(1, 1), padding=((1, 1), (1, 1)),
        dimension_numbers=("NCHW", "OIHW", "NCHW"))
    ref = v1 * jax.nn.sigmoid(v1)

    assert out.shape == (N, Cout, H, W + 2), out.shape
    np.testing.assert_allclose(np.asarray(out), np.asarray(ref), rtol=1e-5, atol=1e-5)

    print("KERNEL_OK")
</pallas_src>

<mosaic_0001>
module attributes {stable_mosaic.version = 11 : i64} {
  func.func @_conv_swish_kernel(%arg0: i32, %arg1: memref<40x256xf32, #tpu.memory_space<vmem>>, %arg2: memref<48x40xf32, #tpu.memory_space<vmem>>, %arg3: memref<16x288xf32, #tpu.memory_space<vmem>>, %arg4: memref<48x256xf32, #tpu.memory_space<vmem>>) attributes {dimension_semantics = [#tpu.dimension_semantics<parallel>], iteration_bounds = array<i64: 2>, scalar_prefetch = 0 : i64, scratch_operands = 1 : i64, tpu.core_type = #tpu.core_type<tc>, window_params = [{transform_indices = @transform_0, window_bounds = array<i64: 40, 256>}, {pipeline_mode = #tpu.pipeline_mode<synchronous>, transform_indices = @transform_1, window_bounds = array<i64: 48, 40>}, {transform_indices = @transform_2, window_bounds = array<i64: 16, 288>}]} {
    %c0 = arith.constant 0 : index
    %c0_0 = arith.constant 0 : index
    %0 = vector.load %arg2[%c0, %c0_0] : memref<48x40xf32, #tpu.memory_space<vmem>>, vector<48x40xf32>
    %c0_1 = arith.constant 0 : index
    %c0_2 = arith.constant 0 : index
    %1 = vector.load %arg1[%c0_1, %c0_2] : memref<40x256xf32, #tpu.memory_space<vmem>>, vector<40x256xf32>
    %cst = arith.constant dense<0.000000e+00> : vector<48x256xf32>
    %2 = tpu.matmul %0, %1, %cst {dimension_numbers = #tpu.dot_dimension_numbers<[1], [0], [0], [1], [0, 0, 1, 1], [], []>} : vector<48x40xf32>, vector<40x256xf32>, vector<48x256xf32> -> vector<48x256xf32>
    %c0_3 = arith.constant 0 : index
    %c0_4 = arith.constant 0 : index
    %3 = vector.load %arg4[%c0_3, %c0_4] : memref<48x256xf32, #tpu.memory_space<vmem>>, vector<48x256xf32>
    tpu.vector_store %arg4[%c0_3, %c0_4], %2 {strides = array<i32>} : memref<48x256xf32, #tpu.memory_space<vmem>>, vector<48x256xf32>,
    %cst_5 = arith.constant 0.000000e+00 : f32
    %4 = vector.broadcast %cst_5 : f32 to vector<16x288xf32>
    %c0_6 = arith.constant 0 : index
    %c0_7 = arith.constant 0 : index
    %5 = vector.load %arg3[%c0_6, %c0_7] : memref<16x288xf32, #tpu.memory_space<vmem>>, vector<16x288xf32>
    tpu.vector_store %arg3[%c0_6, %c0_7], %4 {strides = array<i32>} : memref<16x288xf32, #tpu.memory_space<vmem>>, vector<16x288xf32>,
    %c16 = arith.constant 16 : index
    %c0_8 = arith.constant 0 : index
    %6 = vector.load %arg4[%c16, %c0_8] : memref<48x256xf32, #tpu.memory_space<vmem>>, vector<16x16xf32>
    %c32 = arith.constant 32 : index
    %c16_9 = arith.constant 16 : index
    %7 = vector.load %arg4[%c32, %c16_9] : memref<48x256xf32, #tpu.memory_space<vmem>>, vector<16x16xf32>
    %8 = arith.addf %6, %7 : vector<16x16xf32>
    %9 = arith.negf %8 : vector<16x16xf32>
    %10 = math.exp %9 : vector<16x16xf32>
    %cst_10 = arith.constant 1.000000e+00 : f32
    %11 = vector.broadcast %cst_10 : f32 to vector<16x16xf32>
    %12 = arith.addf %11, %10 : vector<16x16xf32>
    %13 = arith.divf %11, %12 : vector<16x16xf32>
    %14 = arith.mulf %8, %13 : vector<16x16xf32>
    %c0_11 = arith.constant 0 : index
    %c1 = arith.constant 1 : index
    %15 = vector.load %arg3[%c0_11, %c1] : memref<16x288xf32, #tpu.memory_space<vmem>>, vector<16x16xf32>
    tpu.vector_store %arg3[%c0_11, %c1], %14 {strides = array<i32>} : memref<16x288xf32, #tpu.memory_space<vmem>>, vector<16x16xf32>,
    %c16_12 = arith.constant 16 : index
    %c16_13 = arith.constant 16 : index
    %16 = vector.load %arg4[%c16_12, %c16_13] : memref<48x256xf32, #tpu.memory_space<vmem>>, vector<16x16xf32>
    %c0_14 = arith.constant 0 : index
    %c0_15 = arith.constant 0 : index
    %17 = vector.load %arg4[%c0_14, %c0_15] : memref<48x256xf32, #tpu.memory_space<vmem>>, vector<16x16xf32>
    %18 = arith.addf %16, %17 : vector<16x16xf32>
    %c32_16 = arith.constant 32 : index
    %c32_17 = arith.constant 32 : index
    %19 = vector.load %arg4[%c32_16, %c32_17] : memref<48x256xf32, #tpu.memory_space<vmem>>, vector<16x16xf32>
    %20 = arith.addf %18, %19 : vector<16x16xf32>
    %21 = arith.negf %20 : vector<16x16xf32>
    %22 = math.exp %21 : vector<16x16xf32>
    %cst_18 = arith.constant 1.000000e+00 : f32
    %23 = vector.broadcast %cst_18 : f32 to vector<16x16xf32>
    %24 = arith.addf %23, %22 : vector<16x16xf32>
    %25 = arith.divf %23, %24 : vector<16x16xf32>
    %26 = arith.mulf %20, %25 : vector<16x16xf32>
    %c0_19 = arith.constant 0 : index
    %c19 = arith.constant 19 : index
    %27 = vector.load %arg3[%c0_19, %c19] : memref<16x288xf32, #tpu.memory_space<vmem>>, vector<16x16xf32>
    tpu.vector_store %arg3[%c0_19, %c19], %26 {strides = array<i32>} : memref<16x288xf32, #tpu.memory_space<vmem>>, vector<16x16xf32>,
    %c16_20 = arith.constant 16 : index
    %c32_21 = arith.constant 32 : index
    %28 = vector.load %arg4[%c16_20, %c32_21] : memref<48x256xf32, #tpu.memory_space<vmem>>, vector<16x16xf32>
    %c0_22 = arith.constant 0 : index
    %c16_23 = arith.constant 16 : index
    %29 = vector.load %arg4[%c0_22, %c16_23] : memref<48x256xf32, #tpu.memory_space<vmem>>, vector<16x16xf32>
    %30 = arith.addf %28, %29 : vector<16x16xf32>
    %c32_24 = arith.constant 32 : index
    %c48 = arith.constant 48 : index
    %31 = vector.load %arg4[%c32_24, %c48] : memref<48x256xf32, #tpu.memory_space<vmem>>, vector<16x16xf32>
    %32 = arith.addf %30, %31 : vector<16x16xf32>
    %33 = arith.negf %32 : vector<16x16xf32>
    %34 = math.exp %33 : vector<16x16xf32>
    %cst_25 = arith.constant 1.000000e+00 : f32
    %35 = vector.broadcast %cst_25 : f32 to vector<16x16xf32>
    %36 = arith.addf %35, %34 : vector<16x16xf32>
    %37 = arith.divf %35, %36 : vector<16x16xf32>
    %38 = arith.mulf %32, %37 : vector<16x16xf32>
    %c0_26 = arith.constant 0 : index
    %c37 = arith.constant 37 : index
    %39 = vector.load %arg3[%c0_26, %c37] : memref<16x288xf32, #tpu.memory_space<vmem>>, vector<16x16xf32>
    tpu.vector_store %arg3[%c0_26, %c37], %38 {strides = array<i32>} : memref<16x288xf32, #tpu.memory_space<vmem>>, vector<16x16xf32>,
    %c16_27 = arith.constant 16 : index
    %c48_28 = arith.constant 48 : index
    %40 = vector.load %arg4[%c16_27, %c48_28] : memref<48x256xf32, #tpu.memory_space<vmem>>, vector<16x16xf32>
    %c0_29 = arith.constant 0 : index
    %c32_30 = arith.constant 32 : index
    %41 = vector.load %arg4[%c0_29, %c32_30] : memref<48x256xf32, #tpu.memory_space<vmem>>, vector<16x16xf32>
    %42 = arith.addf %40, %41 : vector<16x16xf32>
    %c32_31 = arith.constant 32 : index
    %c64 = arith.constant 64 : index
    %43 = vector.load %arg4[%c32_31, %c64] : memref<48x256xf32, #tpu.memory_space<vmem>>, vector<16x16xf32>
    %44 = arith.addf %42, %43 : vector<16x16xf32>
    %45 = arith.negf %44 : vector<16x16xf32>
    %46 = math.exp %45 : vector<16x16xf32>
    %cst_32 = arith.constant 1.000000e+00 : f32
    %47 = vector.broadcast %cst_32 : f32 to vector<16x16xf32>
    %48 = arith.addf %47, %46 : vector<16x16xf32>
    %49 = arith.divf %47, %48 : vector<16x16xf32>
    %50 = arith.mulf %44, %49 : vector<16x16xf32>
    %c0_33 = arith.constant 0 : index
    %c55 = arith.constant 55 : index
    %51 = vector.load %arg3[%c0_33, %c55] : memref<16x288xf32, #tpu.memory_space<vmem>>, vector<16x16xf32>
    tpu.vector_store %arg3[%c0_33, %c55], %50 {strides = array<i32>} : memref<16x288xf32, #tpu.memory_space<vmem>>, vector<16x16xf32>,
    %c16_34 = arith.constant 16 : index
    %c64_35 = arith.constant 64 : index
    %52 = vector.load %arg4[%c16_34, %c64_35] : memref<48x256xf32, #tpu.memory_space<vmem>>, vector<16x16xf32>
    %c0_36 = arith.constant 0 : index
    %c48_37 = arith.constant 48 : index
    %53 = vector.load %arg4[%c0_36, %c48_37] : memref<48x256xf32, #tpu.memory_space<vmem>>, vector<16x16xf32>
    %54 = arith.addf %52, %53 : vector<16x16xf32>
    %c32_38 = arith.constant 32 : index
    %c80 = arith.constant 80 : index
    %55 = vector.load %arg4[%c32_38, %c80] : memref<48x256xf32, #tpu.memory_space<vmem>>, vector<16x16xf32>
    %56 = arith.addf %54, %55 : vector<16x16xf32>
    %57 = arith.negf %56 : vector<16x16xf32>
    %58 = math.exp %57 : vector<16x16xf32>
    %cst_39 = arith.constant 1.000000e+00 : f32
    %59 = vector.broadcast %cst_39 : f32 to vector<16x16xf32>
    %60 = arith.addf %59, %58 : vector<16x16xf32>
    %61 = arith.divf %59, %60 : vector<16x16xf32>
    %62 = arith.mulf %56, %61 : vector<16x16xf32>
    %c0_40 = arith.constant 0 : index
    %c73 = arith.constant 73 : index
    %63 = vector.load %arg3[%c0_40, %c73] : memref<16x288xf32, #tpu.memory_space<vmem>>, vector<16x16xf32>
    tpu.vector_store %arg3[%c0_40, %c73], %62 {strides = array<i32>} : memref<16x288xf32, #tpu.memory_space<vmem>>, vector<16x16xf32>,
    %c16_41 = arith.constant 16 : index
    %c80_42 = arith.constant 80 : index
    %64 = vector.load %arg4[%c16_41, %c80_42] : memref<48x256xf32, #tpu.memory_space<vmem>>, vector<16x16xf32>
    %c0_43 = arith.constant 0 : index
    %c64_44 = arith.constant 64 : index
    %65 = vector.load %arg4[%c0_43, %c64_44] : memref<48x256xf32, #tpu.memory_space<vmem>>, vector<16x16xf32>
    %66 = arith.addf %64, %65 : vector<16x16xf32>
    %c32_45 = arith.constant 32 : index
    %c96 = arith.constant 96 : index
    %67 = vector.load %arg4[%c32_45, %c96] : memref<48x256xf32, #tpu.memory_space<vmem>>, vector<16x16xf32>
    %68 = arith.addf %66, %67 : vector<16x16xf32>
    %69 = arith.negf %68 : vector<16x16xf32>
    %70 = math.exp %69 : vector<16x16xf32>
    %cst_46 = arith.constant 1.000000e+00 : f32
    %71 = vector.broadcast %cst_46 : f32 to vector<16x16xf32>
    %72 = arith.addf %71, %70 : vector<16x16xf32>
    %73 = arith.divf %71, %72 : vector<16x16xf32>
    %74 = arith.mulf %68, %73 : vector<16x16xf32>
    %c0_47 = arith.constant 0 : index
    %c91 = arith.constant 91 : index
    %75 = vector.load %arg3[%c0_47, %c91] : memref<16x288xf32, #tpu.memory_space<vmem>>, vector<16x16xf32>
    tpu.vector_store %arg3[%c0_47, %c91], %74 {strides = array<i32>} : memref<16x288xf32, #tpu.memory_space<vmem>>, vector<16x16xf32>,
    %c16_48 = arith.constant 16 : index
    %c96_49 = arith.constant 96 : index
    %76 = vector.load %arg4[%c16_48, %c96_49] : memref<48x256xf32, #tpu.memory_space<vmem>>, vector<16x16xf32>
    %c0_50 = arith.constant 0 : index
    %c80_51 = arith.constant 80 : index
    %77 = vector.load %arg4[%c0_50, %c80_51] : memref<48x256xf32, #tpu.memory_space<vmem>>, vector<16x16xf32>
    %78 = arith.addf %76, %77 : vector<16x16xf32>
    %c32_52 = arith.constant 32 : index
    %c112 = arith.constant 112 : index
    %79 = vector.load %arg4[%c32_52, %c112] : memref<48x256xf32, #tpu.memory_space<vmem>>, vector<16x16xf32>
    %80 = arith.addf %78, %79 : vector<16x16xf32>
    %81 = arith.negf %80 : vector<16x16xf32>
    %82 = math.exp %81 : vector<16x16xf32>
    %cst_53 = arith.constant 1.000000e+00 : f32
    %83 = vector.broadcast %cst_53 : f32 to vector<16x16xf32>
    %84 = arith.addf %83, %82 : vector<16x16xf32>
    %85 = arith.divf %83, %84 : vector<16x16xf32>
    %86 = arith.mulf %80, %85 : vector<16x16xf32>
    %c0_54 = arith.constant 0 : index
    %c109 = arith.constant 109 : index
    %87 = vector.load %arg3[%c0_54, %c109] : memref<16x288xf32, #tpu.memory_space<vmem>>, vector<16x16xf32>
    tpu.vector_store %arg3[%c0_54, %c109], %86 {strides = array<i32>} : memref<16x288xf32, #tpu.memory_space<vmem>>, vector<16x16xf32>,
    %c16_55 = arith.constant 16 : index
    %c112_56 = arith.constant 112 : index
    %88 = vector.load %arg4[%c16_55, %c112_56] : memref<48x256xf32, #tpu.memory_space<vmem>>, vector<16x16xf32>
    %c0_57 = arith.constant 0 : index
    %c96_58 = arith.constant 96 : index
    %89 = vector.load %arg4[%c0_57, %c96_58] : memref<48x256xf32, #tpu.memory_space<vmem>>, vector<16x16xf32>
    %90 = arith.addf %88, %89 : vector<16x16xf32>
    %c32_59 = arith.constant 32 : index
    %c128 = arith.constant 128 : index
    %91 = vector.load %arg4[%c32_59, %c128] : memref<48x256xf32, #tpu.memory_space<vmem>>, vector<16x16xf32>
    %92 = arith.addf %90, %91 : vector<16x16xf32>
    %93 = arith.negf %92 : vector<16x16xf32>
    %94 = math.exp %93 : vector<16x16xf32>
    %cst_60 = arith.constant 1.000000e+00 : f32
    %95 = vector.broadcast %cst_60 : f32 to vector<16x16xf32>
    %96 = arith.addf %95, %94 : vector<16x16xf32>
    %97 = arith.divf %95, %96 : vector<16x16xf32>
    %98 = arith.mulf %92, %97 : vector<16x16xf32>
    %c0_61 = arith.constant 0 : index
    %c127 = arith.constant 127 : index
    %99 = vector.load %arg3[%c0_61, %c127] : memref<16x288xf32, #tpu.memory_space<vmem>>, vector<16x16xf32>
    tpu.vector_store %arg3[%c0_61, %c127], %98 {strides = array<i32>} : memref<16x288xf32, #tpu.memory_space<vmem>>, vector<16x16xf32>,
    %c16_62 = arith.constant 16 : index
    %c128_63 = arith.constant 128 : index
    %100 = vector.load %arg4[%c16_62, %c128_63] : memref<48x256xf32, #tpu.memory_space<vmem>>, vector<16x16xf32>
    %c0_64 = arith.constant 0 : index
    %c112_65 = arith.constant 112 : index
    %101 = vector.load %arg4[%c0_64, %c112_65] : memref<48x256xf32, #tpu.memory_space<vmem>>, vector<16x16xf32>
    %102 = arith.addf %100, %101 : vector<16x16xf32>
    %c32_66 = arith.constant 32 : index
    %c144 = arith.constant 144 : index
    %103 = vector.load %arg4[%c32_66, %c144] : memref<48x256xf32, #tpu.memory_space<vmem>>, vector<16x16xf32>
    %104 = arith.addf %102, %103 : vector<16x16xf32>
    %105 = arith.negf %104 : vector<16x16xf32>
    %106 = math.exp %105 : vector<16x16xf32>
    %cst_67 = arith.constant 1.000000e+00 : f32
    %107 = vector.broadcast %cst_67 : f32 to vector<16x16xf32>
    %108 = arith.addf %107, %106 : vector<16x16xf32>
    %109 = arith.divf %107, %108 : vector<16x16xf32>
    %110 = arith.mulf %104, %109 : vector<16x16xf32>
    %c0_68 = arith.constant 0 : index
    %c145 = arith.constant 145 : index
    %111 = vector.load %arg3[%c0_68, %c145] : memref<16x288xf32, #tpu.memory_space<vmem>>, vector<16x16xf32>
    tpu.vector_store %arg3[%c0_68, %c145], %110 {strides = array<i32>} : memref<16x288xf32, #tpu.memory_space<vmem>>, vector<16x16xf32>,
    %c16_69 = arith.constant 16 : index
    %c144_70 = arith.constant 144 : index
    %112 = vector.load %arg4[%c16_69, %c144_70] : memref<48x256xf32, #tpu.memory_space<vmem>>, vector<16x16xf32>
    %c0_71 = arith.constant 0 : index
    %c128_72 = arith.constant 128 : index
    %113 = vector.load %arg4[%c0_71, %c128_72] : memref<48x256xf32, #tpu.memory_space<vmem>>, vector<16x16xf32>
    %114 = arith.addf %112, %113 : vector<16x16xf32>
    %c32_73 = arith.constant 32 : index
    %c160 = arith.constant 160 : index
    %115 = vector.load %arg4[%c32_73, %c160] : memref<48x256xf32, #tpu.memory_space<vmem>>, vector<16x16xf32>
    %116 = arith.addf %114, %115 : vector<16x16xf32>
    %117 = arith.negf %116 : vector<16x16xf32>
    %118 = math.exp %117 : vector<16x16xf32>
    %cst_74 = arith.constant 1.000000e+00 : f32
    %119 = vector.broadcast %cst_74 : f32 to vector<16x16xf32>
    %120 = arith.addf %119, %118 : vector<16x16xf32>
    %121 = arith.divf %119, %120 : vector<16x16xf32>
    %122 = arith.mulf %116, %121 : vector<16x16xf32>
    %c0_75 = arith.constant 0 : index
    %c163 = arith.constant 163 : index
    %123 = vector.load %arg3[%c0_75, %c163] : memref<16x288xf32, #tpu.memory_space<vmem>>, vector<16x16xf32>
    tpu.vector_store %arg3[%c0_75, %c163], %122 {strides = array<i32>} : memref<16x288xf32, #tpu.memory_space<vmem>>, vector<16x16xf32>,
    %c16_76 = arith.constant 16 : index
    %c160_77 = arith.constant 160 : index
    %124 = vector.load %arg4[%c16_76, %c160_77] : memref<48x256xf32, #tpu.memory_space<vmem>>, vector<16x16xf32>
    %c0_78 = arith.constant 0 : index
    %c144_79 = arith.constant 144 : index
    %125 = vector.load %arg4[%c0_78, %c144_79] : memref<48x256xf32, #tpu.memory_space<vmem>>, vector<16x16xf32>
    %126 = arith.addf %124, %125 : vector<16x16xf32>
    %c32_80 = arith.constant 32 : index
    %c176 = arith.constant 176 : index
    %127 = vector.load %arg4[%c32_80, %c176] : memref<48x256xf32, #tpu.memory_space<vmem>>, vector<16x16xf32>
    %128 = arith.addf %126, %127 : vector<16x16xf32>
    %129 = arith.negf %128 : vector<16x16xf32>
    %130 = math.exp %129 : vector<16x16xf32>
    %cst_81 = arith.constant 1.000000e+00 : f32
    %131 = vector.broadcast %cst_81 : f32 to vector<16x16xf32>
    %132 = arith.addf %131, %130 : vector<16x16xf32>
    %133 = arith.divf %131, %132 : vector<16x16xf32>
    %134 = arith.mulf %128, %133 : vector<16x16xf32>
    %c0_82 = arith.constant 0 : index
    %c181 = arith.constant 181 : index
    %135 = vector.load %arg3[%c0_82, %c181] : memref<16x288xf32, #tpu.memory_space<vmem>>, vector<16x16xf32>
    tpu.vector_store %arg3[%c0_82, %c181], %134 {strides = array<i32>} : memref<16x288xf32, #tpu.memory_space<vmem>>, vector<16x16xf32>,
    %c16_83 = arith.constant 16 : index
    %c176_84 = arith.constant 176 : index
    %136 = vector.load %arg4[%c16_83, %c176_84] : memref<48x256xf32, #tpu.memory_space<vmem>>, vector<16x16xf32>
    %c0_85 = arith.constant 0 : index
    %c160_86 = arith.constant 160 : index
    %137 = vector.load %arg4[%c0_85, %c160_86] : memref<48x256xf32, #tpu.memory_space<vmem>>, vector<16x16xf32>
    %138 = arith.addf %136, %137 : vector<16x16xf32>
    %c32_87 = arith.constant 32 : index
    %c192 = arith.constant 192 : index
    %139 = vector.load %arg4[%c32_87, %c192] : memref<48x256xf32, #tpu.memory_space<vmem>>, vector<16x16xf32>
    %140 = arith.addf %138, %139 : vector<16x16xf32>
    %141 = arith.negf %140 : vector<16x16xf32>
    %142 = math.exp %141 : vector<16x16xf32>
    %cst_88 = arith.constant 1.000000e+00 : f32
    %143 = vector.broadcast %cst_88 : f32 to vector<16x16xf32>
    %144 = arith.addf %143, %142 : vector<16x16xf32>
    %145 = arith.divf %143, %144 : vector<16x16xf32>
    %146 = arith.mulf %140, %145 : vector<16x16xf32>
    %c0_89 = arith.constant 0 : index
    %c199 = arith.constant 199 : index
    %147 = vector.load %arg3[%c0_89, %c199] : memref<16x288xf32, #tpu.memory_space<vmem>>, vector<16x16xf32>
    tpu.vector_store %arg3[%c0_89, %c199], %146 {strides = array<i32>} : memref<16x288xf32, #tpu.memory_space<vmem>>, vector<16x16xf32>,
    %c16_90 = arith.constant 16 : index
    %c192_91 = arith.constant 192 : index
    %148 = vector.load %arg4[%c16_90, %c192_91] : memref<48x256xf32, #tpu.memory_space<vmem>>, vector<16x16xf32>
    %c0_92 = arith.constant 0 : index
    %c176_93 = arith.constant 176 : index
    %149 = vector.load %arg4[%c0_92, %c176_93] : memref<48x256xf32, #tpu.memory_space<vmem>>, vector<16x16xf32>
    %150 = arith.addf %148, %149 : vector<16x16xf32>
    %c32_94 = arith.constant 32 : index
    %c208 = arith.constant 208 : index
    %151 = vector.load %arg4[%c32_94, %c208] : memref<48x256xf32, #tpu.memory_space<vmem>>, vector<16x16xf32>
    %152 = arith.addf %150, %151 : vector<16x16xf32>
    %153 = arith.negf %152 : vector<16x16xf32>
    %154 = math.exp %153 : vector<16x16xf32>
    %cst_95 = arith.constant 1.000000e+00 : f32
    %155 = vector.broadcast %cst_95 : f32 to vector<16x16xf32>
    %156 = arith.addf %155, %154 : vector<16x16xf32>
    %157 = arith.divf %155, %156 : vector<16x16xf32>
    %158 = arith.mulf %152, %157 : vector<16x16xf32>
    %c0_96 = arith.constant 0 : index
    %c217 = arith.constant 217 : index
    %159 = vector.load %arg3[%c0_96, %c217] : memref<16x288xf32, #tpu.memory_space<vmem>>, vector<16x16xf32>
    tpu.vector_store %arg3[%c0_96, %c217], %158 {strides = array<i32>} : memref<16x288xf32, #tpu.memory_space<vmem>>, vector<16x16xf32>,
    %c16_97 = arith.constant 16 : index
    %c208_98 = arith.constant 208 : index
    %160 = vector.load %arg4[%c16_97, %c208_98] : memref<48x256xf32, #tpu.memory_space<vmem>>, vector<16x16xf32>
    %c0_99 = arith.constant 0 : index
    %c192_100 = arith.constant 192 : index
    %161 = vector.load %arg4[%c0_99, %c192_100] : memref<48x256xf32, #tpu.memory_space<vmem>>, vector<16x16xf32>
    %162 = arith.addf %160, %161 : vector<16x16xf32>
    %c32_101 = arith.constant 32 : index
    %c224 = arith.constant 224 : index
    %163 = vector.load %arg4[%c32_101, %c224] : memref<48x256xf32, #tpu.memory_space<vmem>>, vector<16x16xf32>
    %164 = arith.addf %162, %163 : vector<16x16xf32>
    %165 = arith.negf %164 : vector<16x16xf32>
    %166 = math.exp %165 : vector<16x16xf32>
    %cst_102 = arith.constant 1.000000e+00 : f32
    %167 = vector.broadcast %cst_102 : f32 to vector<16x16xf32>
    %168 = arith.addf %167, %166 : vector<16x16xf32>
    %169 = arith.divf %167, %168 : vector<16x16xf32>
    %170 = arith.mulf %164, %169 : vector<16x16xf32>
    %c0_103 = arith.constant 0 : index
    %c235 = arith.constant 235 : index
    %171 = vector.load %arg3[%c0_103, %c235] : memref<16x288xf32, #tpu.memory_space<vmem>>, vector<16x16xf32>
    tpu.vector_store %arg3[%c0_103, %c235], %170 {strides = array<i32>} : memref<16x288xf32, #tpu.memory_space<vmem>>, vector<16x16xf32>,
    %c16_104 = arith.constant 16 : index
    %c224_105 = arith.constant 224 : index
    %172 = vector.load %arg4[%c16_104, %c224_105] : memref<48x256xf32, #tpu.memory_space<vmem>>, vector<16x16xf32>
    %c0_106 = arith.constant 0 : index
    %c208_107 = arith.constant 208 : index
    %173 = vector.load %arg4[%c0_106, %c208_107] : memref<48x256xf32, #tpu.memory_space<vmem>>, vector<16x16xf32>
    %174 = arith.addf %172, %173 : vector<16x16xf32>
    %c32_108 = arith.constant 32 : index
    %c240 = arith.constant 240 : index
    %175 = vector.load %arg4[%c32_108, %c240] : memref<48x256xf32, #tpu.memory_space<vmem>>, vector<16x16xf32>
    %176 = arith.addf %174, %175 : vector<16x16xf32>
    %177 = arith.negf %176 : vector<16x16xf32>
    %178 = math.exp %177 : vector<16x16xf32>
    %cst_109 = arith.constant 1.000000e+00 : f32
    %179 = vector.broadcast %cst_109 : f32 to vector<16x16xf32>
    %180 = arith.addf %179, %178 : vector<16x16xf32>
    %181 = arith.divf %179, %180 : vector<16x16xf32>
    %182 = arith.mulf %176, %181 : vector<16x16xf32>
    %c0_110 = arith.constant 0 : index
    %c253 = arith.constant 253 : index
    %183 = vector.load %arg3[%c0_110, %c253] : memref<16x288xf32, #tpu.memory_space<vmem>>, vector<16x16xf32>
    tpu.vector_store %arg3[%c0_110, %c253], %182 {strides = array<i32>} : memref<16x288xf32, #tpu.memory_space<vmem>>, vector<16x16xf32>,
    %c16_111 = arith.constant 16 : index
    %c240_112 = arith.constant 240 : index
    %184 = vector.load %arg4[%c16_111, %c240_112] : memref<48x256xf32, #tpu.memory_space<vmem>>, vector<16x16xf32>
    %c0_113 = arith.constant 0 : index
    %c224_114 = arith.constant 224 : index
    %185 = vector.load %arg4[%c0_113, %c224_114] : memref<48x256xf32, #tpu.memory_space<vmem>>, vector<16x16xf32>
    %186 = arith.addf %184, %185 : vector<16x16xf32>
    %187 = arith.negf %186 : vector<16x16xf32>
    %188 = math.exp %187 : vector<16x16xf32>
    %cst_115 = arith.constant 1.000000e+00 : f32
    %189 = vector.broadcast %cst_115 : f32 to vector<16x16xf32>
    %190 = arith.addf %189, %188 : vector<16x16xf32>
    %191 = arith.divf %189, %190 : vector<16x16xf32>
    %192 = arith.mulf %186, %191 : vector<16x16xf32>
    %c0_116 = arith.constant 0 : index
    %c271 = arith.constant 271 : index
    %193 = vector.load %arg3[%c0_116, %c271] : memref<16x288xf32, #tpu.memory_space<vmem>>, vector<16x16xf32>
    tpu.vector_store %arg3[%c0_116, %c271], %192 {strides = array<i32>} : memref<16x288xf32, #tpu.memory_space<vmem>>, vector<16x16xf32>,
    return
  }
  func.func @transform_0(%arg0: i32) -> (i32, i32) {
    %c0_i32 = arith.constant 0 : i32
    %c0_i32_0 = arith.constant 0 : i32
    return %arg0, %c0_i32 : i32, i32
  }
  func.func @transform_1(%arg0: i32) -> (i32, i32) {
    %c0_i32 = arith.constant 0 : i32
    %c0_i32_0 = arith.constant 0 : i32
    %c0_i32_1 = arith.constant 0 : i32
    return %c0_i32, %c0_i32_0 : i32, i32
  }
  func.func @transform_2(%arg0: i32) -> (i32, i32) {
    %c0_i32 = arith.constant 0 : i32
    %c0_i32_0 = arith.constant 0 : i32
    return %arg0, %c0_i32 : i32, i32
  }
}

</mosaic_0001>

<llo_original>
// kernel: tpu_custom_call.1
$region0: #{tpu_custom_call.1}
  #allocation0 [shape = 'u32[]', space=smem, size = 0x4, offset = 0x4, fixed_abs, tag = 'smem constant byte address 0x4 - core index']
  #allocation1 [shape = 'u32[144,128]{1,0:T(1,128)}', space=vmem, size = 0x12000, scoped, tag = 'internal scratch']
  #allocation2 [shape = 'f32[48,256]{1,0:T(8,128)}', space=vmem, size = 0xc000, scoped, tag = 'scratch operand']
  %s0 = inlined_call_operand.hbm [shape: f32[80,256], index: 0, kind: input, shape index: {}]
  %s1 = inlined_call_operand.vmem [shape: f32[48,40], index: 1, kind: input, shape index: {}]
  %s2 = inlined_call_operand.hbm [shape: f32[32,288], index: 2, kind: output, shape index: {}]
  %s3 = sld [smem:[#allocation0]]
  $region45: #{tpu_custom_call.1} parent=0
    _
  %s5 = ssub.s32 1, %s3
  %s6 = scalar_select 0, %s5, %s3
  $region1: #{tpu_custom_call.1} parent=0
    #allocation3 [shape = 'u8[81920]{0}', space=vmem, size = 0x14000, scoped, tag = 'input window, operand 0']
    #allocation4 [shape = 's32[2]{0}', space=sflag, size = 0x8, scoped, tag = 'scoped memory for tpu_custom_call.1']
    #allocation5 [shape = 's32[2]{0}', space=sflag, size = 0x8, scoped, tag = 'scoped memory for tpu_custom_call.1']
    #allocation6 [shape = 'u8[49152]{0}', space=vmem, size = 0xc000, scoped, tag = 'output window, operand 0']
    %7 = vsyncpa [#allocation4], 0
    %s8 = scalar_lea.sflag [#allocation4], 1
    %9 = vsyncpa %s8, 0
    %10 = vsyncpa [#allocation5], 0
    %s11 = scalar_lea.sflag [#allocation5], 1
    %12 = vsyncpa %s11, 0
    loop: start=0, step=1, limit=4
    $region2: #{tpu_custom_call.1} parent=1 // loop_pre_header
      _
    $region3: #{tpu_custom_call.1} parent=1 // loop_header
      %s14 = sphi 0, %s18
      %p15 = scmp.ge.s32.totalorder %s14, 4
      %s24 = sphi 0, %s26
      %s27 = sphi 0, %s24
      %s28 = sphi 0, %s27
      %s44 = sphi 0, %s28
      %s48 = sphi 0, %s48
      %s50 = sphi 0, %s48
      %s51 = sphi 0, %s50
      %s65 = sphi 0, %s51
      %s71 = sphi 0, %s73
      %s74 = sphi 0, %s71
      %s75 = sphi 0, %s74
      %s91 = sphi 0, %s75
    $region4: #{tpu_custom_call.1} parent=1 // loop_header_branch
      %17 = sbr.rel (%p15) target = $region8
    $region5: #{tpu_custom_call.1} parent=1 // loop_body
      %s19 = ssub.s32 %s14, 1
      %s20 = ssub.s32 %s14, 2
      %s21 = sadd.s32 %s14, 1
      %s22 = ssub.s32 %s14, %s21
      %p23 = scmp.eq.s32.totalorder %s22, 0
      %s25 = sadd.s32 %s24, 1
      %s26 = scalar_select %p23, %s24, %s25
      %p29 = pneg %p23
      %p30 = scmp.eq.s32.totalorder %s14, 1
      %p31 = por %p29, %p30
      %p32 = scmp.ne.s32.totalorder %s24, %s27
      %p33 = scmp.eq.s32.totalorder %s14, 0
      %p34 = por %p32, %p33
      %p35 = scmp.ne.s32.totalorder %s24, %s27
      %p36 = scmp.eq.s32.totalorder %s19, 1
      %p37 = por %p35, %p36
      %p38 = scmp.ne.s32.totalorder %s27, %s28
      %p39 = scmp.eq.s32.totalorder %s19, 0
      %p40 = por %p38, %p39
      %p41 = scmp.ne.s32.totalorder %s27, %s28
      %p42 = scmp.eq.s32.totalorder %s20, 1
      %p43 = por %p41, %p42
      %p45 = scmp.ne.s32.totalorder %s28, %s44
      %p46 = scmp.eq.s32.totalorder %s20, 0
      %p47 = por %p45, %p46
      %s49 = sadd.s32 %s48, 1
      %p52 = scmp.eq.s32.totalorder %s14, 1
      %p53 = scmp.ne.s32.totalorder %s48, %s50
      %p54 = scmp.eq.s32.totalorder %s14, 0
      %p55 = por %p53, %p54
      %p56 = scmp.ne.s32.totalorder %s48, %s50
      %p57 = scmp.eq.s32.totalorder %s19, 1
      %p58 = por %p56, %p57
      %p59 = scmp.ne.s32.totalorder %s50, %s51
      %p60 = scmp.eq.s32.totalorder %s19, 0
      %p61 = por %p59, %p60
      %p62 = scmp.ne.s32.totalorder %s50, %s51
      %p63 = scmp.eq.s32.totalorder %s20, 1
      %p64 = por %p62, %p63
      %p66 = scmp.ne.s32.totalorder %s51, %s65
      %p67 = scmp.eq.s32.totalorder %s20, 0
      %p68 = por %p66, %p67
      %s69 = ssub.s32 %s14, %s21
      %p70 = scmp.eq.s32.totalorder %s69, 0
      %s72 = sadd.s32 %s71, 1
      %s73 = scalar_select %p70, %s71, %s72
      %p76 = pneg %p70
      %p77 = scmp.eq.s32.totalorder %s14, 1
      %p78 = por %p76, %p77
      %p79 = scmp.ne.s32.totalorder %s71, %s74
      %p80 = scmp.eq.s32.totalorder %s14, 0
      %p81 = por %p79, %p80
      %p82 = scmp.ne.s32.totalorder %s71, %s74
      %p83 = scmp.eq.s32.totalorder %s19, 1
      %p84 = por %p82, %p83
      %p85 = scmp.ne.s32.totalorder %s74, %s75
      %p86 = scmp.eq.s32.totalorder %s19, 0
      %p87 = por %p85, %p86
      %p88 = scmp.ne.s32.totalorder %s74, %s75
      %p89 = scmp.eq.s32.totalorder %s20, 1
      %p90 = por %p88, %p89
      %p92 = scmp.ne.s32.totalorder %s75, %s91
      %p93 = scmp.eq.s32.totalorder %s20, 0
      %p94 = por %p92, %p93
      %p95 = scmp.le.s32.totalorder 1, %s14
      %p96 = scmp.lt.s32.totalorder %s14, 3
      %p97 = pnand %p95, %p96
      %p98 = pneg %p97
      // Predicated region
      $region9: #{tpu_custom_call.1} parent=5 // pred_check
        _
      $region10: #{tpu_custom_call.1} parent=5 // pred_check_branch
        %100 = sbr.rel (%p97) target = $region12
      $region11: #{tpu_custom_call.1} parent=5 // pred_region
        %s101 = ssub.s32 %s14, 1
        // Predicated region
        $region13: #{tpu_custom_call.1} parent=11 // pred_check
          %p102 = pneg %p61
        $region14: #{tpu_custom_call.1} parent=11 // pred_check_branch
          %104 = sbr.rel (%p102) target = $region16
        $region15: #{tpu_custom_call.1} parent=11 // pred_region
          _
        $region16: #{tpu_custom_call.1} parent=11 // pred_fallthru
          _
      $region12: #{tpu_custom_call.1} parent=5 // pred_fallthru
        _
      %p105 = scmp.lt.s32.totalorder %s14, 2
      // Predicated region
      $region17: #{tpu_custom_call.1} parent=5 // pred_check
        %p106 = pneg %p105
      $region18: #{tpu_custom_call.1} parent=5 // pred_check_branch
        %108 = sbr.rel (%p106) target = $region20
      $region19: #{tpu_custom_call.1} parent=5 // pred_region
        // Predicated region
        $region21: #{tpu_custom_call.1} parent=19 // pred_check
          %p109 = pneg %p34
        $region22: #{tpu_custom_call.1} parent=19 // pred_check_branch
          %111 = sbr.rel (%p109) target = $region24
        $region23: #{tpu_custom_call.1} parent=19 // pred_region
          %s112 = sand.u32 %s24, 1
          %s113 = scalar_lea.sflag [#allocation4], %s112
          %s114 = sand.u32 %s24, 1
          %s115 = smul.addr %s114, 80
          %s116 = scalar_lea.vmem [#allocation3], %s115
          %s117 = smul.u32 5, %s14
          %s119 = ssub.s32 1280, 1280
          %120 = vsyncadd %s113, %s119
          %s121 = smul.addr %s117, 2
          %s122 = smul.addr %s121, 128
          %s123 = scalar_lea.hbm %s0, %s122
          %s124 = sshll.u32 %s116, 4
          %s125 = int_to_ptr.vmem [resolvable:$true] %s124
          %130 = dma.hbm_to_vmem [thread:$0]  %s123, 1280, %s125, %s113, 256, 256, 16
        $region24: #{tpu_custom_call.1} parent=19 // pred_fallthru
          _
      $region20: #{tpu_custom_call.1} parent=5 // pred_fallthru
        _
      %p131 = scmp.le.s32.totalorder 1, %s14
      %p132 = scmp.lt.s32.totalorder %s14, 3
      %p133 = pnand %p131, %p132
      %p134 = pneg %p133
      // Predicated region
      $region25: #{tpu_custom_call.1} parent=5 // pred_check
        _
      $region26: #{tpu_custom_call.1} parent=5 // pred_check_branch
        %136 = sbr.rel (%p133) target = $region28
      $region27: #{tpu_custom_call.1} parent=5 // pred_region
        %s137 = ssub.s32 %s14, 1
        %s138 = sand.u32 %s27, 1
        %s139 = scalar_lea.sflag [#allocation4], %s138
        %s140 = sand.u32 %s27, 1
        %s141 = smul.addr %s140, 80
        %s142 = scalar_lea.vmem [#allocation3], %s141
        // Predicated region
        $region29: #{tpu_custom_call.1} parent=27 // pred_check
          %p143 = pneg %p40
        $region30: #{tpu_custom_call.1} parent=27 // pred_check_branch
          %145 = sbr.rel (%p143) target = $region32
        $region31: #{tpu_custom_call.1} parent=27 // pred_region
          %146 = dma.done %s139, 1280
        $region32: #{tpu_custom_call.1} parent=27 // pred_fallthru
          _
        %s147 = sand.u32 %s27, 1
        %s148 = scalar_lea.sflag [#allocation4], %s147
        %s149 = sand.u32 %s27, 1
        %s150 = smul.addr %s149, 80
        %s151 = scalar_lea.vmem [#allocation3], %s150
        %p152 = pneg %p40
        %p153 = pneg %p37
        %p154 = pneg %p61
        %p155 = pneg %p58
        %p156 = pneg %p87
        %p157 = pneg %p84
        %s158 = sand.u32 %s74, 1
        %s159 = scalar_lea.sflag [#allocation5], %s158
        %s160 = sand.u32 %s74, 1
        %s161 = smul.addr %s160, 48
        %s162 = scalar_lea.vmem [#allocation6], %s161
        %s163 = smul.u32 5, %s19
        %s164 = smul.u32 2, %s19
        %v165 = vld [vmem:[%s1] sm:$0xff]
        %v166 = vld [vmem:[%s1 + $0x8] sm:$0xff]
        %v167 = vld [vmem:[%s1 + $0x10] sm:$0xff]
        %v168 = vld [vmem:[%s1 + $0x18] sm:$0xff]
        %v169 = vld [vmem:[%s1 + $0x20] sm:$0xff]
        %v170 = vld [vmem:[%s1 + $0x28] sm:$0xff]
        %v171 = vld [vmem:[%s142] sm:$0xff]
        %v172 = vld [vmem:[%s142 + $0x8] sm:$0xff]
        %v173 = vld [vmem:[%s142 + $0x10] sm:$0xff]
        %v174 = vld [vmem:[%s142 + $0x18] sm:$0xff]
        %v175 = vld [vmem:[%s142 + $0x20] sm:$0xff]
        %v176 = vld [vmem:[%s142 + $0x28] sm:$0xff]
        %v177 = vld [vmem:[%s142 + $0x30] sm:$0xff]
        %v178 = vld [vmem:[%s142 + $0x38] sm:$0xff]
        %v179 = vld [vmem:[%s142 + $0x40] sm:$0xff]
        %v180 = vld [vmem:[%s142 + $0x48] sm:$0xff]
        %vm181 = vcmask 326656
        %v183 = vsel %vm181, %v165, 0
        %v186 = vsel %vm181, %v166, 0
        %v189 = vsel %vm181, %v167, 0
        %v192 = vsel %vm181, %v168, 0
        %v195 = vsel %vm181, %v169, 0
        %v198 = vsel %vm181, %v170, 0
        %200 = vmatprep.subr.mxu0 %v172
        %201 = vmatpush1.msra.mxu0 %v171
        %202 = vmatprep.subr.mxu0 %v174
        %203 = vmatpush1.msra.mxu0 %v173
        %204 = vmatprep.subr.mxu0 %v176
        %205 = vmatpush1.msra.mxu0 %v175
        %206 = vmatprep.subr.mxu0 %v178
        %207 = vmatpush1.msra.mxu0 %v177
        %208 = vmatprep.subr.mxu0 %v180
        %209 = vmatpush1.msra.mxu0 %v179
        %210 = vmatprep.subr.mxu0 0.0
        %211 = vmatpush1.msra.mxu0 0.0
        %212 = vmatprep.subr.mxu0 0.0
        %213 = vmatpush1.msra.mxu0 0.0
        %214 = vmatprep.subr.mxu0 0.0
        %215 = vmatpush1.msra.mxu0 0.0
        %216 = vmatprep.subr.mxu0 0.0
        %217 = vmatpush1.msra.mxu0 0.0
        %218 = vmatprep.subr.mxu0 0.0
        %219 = vmatpush1.msra.mxu0 0.0
        %220 = vmatprep.subr.mxu0 0.0
        %221 = vmatpush1.msra.mxu0 0.0
        %222 = vmatprep.subr.mxu0 0.0
        %223 = vmatpush1.msra.mxu0 0.0
        %224 = vmatprep.subr.mxu0 0.0
        %225 = vmatpush1.msra.mxu0 0.0
        %226 = vmatprep.subr.mxu0 0.0
        %227 = vmatpush1.msra.mxu0 0.0
        %228 = vmatprep.subr.mxu0 0.0
        %229 = vmatpush1.msra.mxu0 0.0
        %230 = vmatprep.subr.mxu0 0.0
        %231 = vmatpush1.msra.mxu0 0.0
        %232 = vmatprep.subr.mxu0 0.0
        %233 = vmatpush1.msra.mxu0 0.0
        %234 = vmatprep.subr.mxu0 0.0
        %235 = vmatpush1.msra.mxu0 0.0
        %236 = vmatprep.subr.mxu0 0.0
        %237 = vmatpush1.msra.mxu0 0.0
        %238 = vmatprep.subr.mxu0 0.0
        %239 = vmatpush1.msra.mxu0 0.0
        %240 = vmatprep.subr.mxu0 0.0
        %241 = vmatpush1.msra.mxu0 0.0
        %242 = vmatprep.subr.mxu0 0.0
        %243 = vmatpush1.msra.mxu0 0.0
        %244 = vmatprep.subr.mxu0 0.0
        %245 = vmatpush1.msra.mxu0 0.0
        %246 = vmatprep.subr.mxu0 0.0
        %247 = vmatpush1.msra.mxu0 0.0
        %248 = vmatprep.subr.mxu0 0.0
        %249 = vmatpush1.msra.mxu0 0.0
        %250 = vmatprep.subr.mxu0 0.0
        %251 = vmatpush1.msra.mxu0 0.0
        %252 = vmatprep.subr.mxu0 0.0
        %253 = vmatpush1.msra.mxu0 0.0
        %254 = vmatprep.subr.mxu0 0.0
        %255 = vmatpush1.msra.mxu0 0.0
        %256 = vmatprep.subr.mxu0 0.0
        %257 = vmatpush1.msra.mxu0 0.0
        %258 = vmatprep.subr.mxu0 0.0
        %259 = vmatpush1.msra.mxu0 0.0
        %260 = vmatprep.subr.mxu0 0.0
        %261 = vmatpush1.msra.mxu0 0.0
        %262 = vmatprep.subr.mxu0 0.0
        %263 = vmatpush1.msra.mxu0 0.0
        %264 = vmatprep.mubr.f32.mxu0 0.0
        %265 = vmatmul.mubr.f32.gmra.mrb[0].mxu0 %v183
        %v266 = vpop.f32.mrb[0].mxu0
        %v267 = vadd.f32 0.0, %v266
        %v268 = vpop.f32.mrb[0].mxu0
        %v269 = vadd.f32 0.0, %v268
        %270 = vmatprep.mubr.f32.mxu0 0.0
        %271 = vmatmul.mubr.f32.gmra.mrb[0].mxu0 %v186
        %v272 = vpop.f32.mrb[0].mxu0
        %v273 = vadd.f32 0.0, %v272
        %v274 = vpop.f32.mrb[0].mxu0
        %v275 = vadd.f32 0.0, %v274
        %276 = vmatprep.mubr.f32.mxu0 0.0
        %277 = vmatmul.mubr.f32.gmra.mrb[0].mxu0 %v189
        %v278 = vpop.f32.mrb[0].mxu0
        %v279 = vadd.f32 0.0, %v278
        %v280 = vpop.f32.mrb[0].mxu0
        %v281 = vadd.f32 0.0, %v280
        %282 = vmatprep.mubr.f32.mxu0 0.0
        %283 = vmatmul.mubr.f32.gmra.mrb[0].mxu0 %v192
        %v284 = vpop.f32.mrb[0].mxu0
        %v285 = vadd.f32 0.0, %v284
        %v286 = vpop.f32.mrb[0].mxu0
        %v287 = vadd.f32 0.0, %v286
        %288 = vmatprep.mubr.f32.mxu0 0.0
        %289 = vmatmul.mubr.f32.gmra.mrb[0].mxu0 %v195
        %v290 = vpop.f32.mrb[0].mxu0
        %v291 = vadd.f32 0.0, %v290
        %v292 = vpop.f32.mrb[0].mxu0
        %v293 = vadd.f32 0.0, %v292
        %294 = vmatprep.mubr.f32.mxu0 0.0
        %295 = vmatmul.mubr.f32.gmra.mrb[0].mxu0 %v198
        %v296 = vpop.f32.mrb[0].mxu0
        %v297 = vadd.f32 0.0, %v296
        %v298 = vpop.f32.mrb[0].mxu0
        %v299 = vadd.f32 0.0, %v298
        %300 = vdwg.mxu0
        %301 = vst [vmem:[#allocation2] sm:$0xff] %v267
        %302 = vst [vmem:[#allocation2 + $0x8] sm:$0xff] %v269
        %303 = vst [vmem:[#allocation2 + $0x10] sm:$0xff] %v273
        %304 = vst [vmem:[#allocation2 + $0x18] sm:$0xff] %v275
        %305 = vst [vmem:[#allocation2 + $0x20] sm:$0xff] %v279
        %306 = vst [vmem:[#allocation2 + $0x28] sm:$0xff] %v281
        %307 = vst [vmem:[#allocation2 + $0x30] sm:$0xff] %v285
        %308 = vst [vmem:[#allocation2 + $0x38] sm:$0xff] %v287
        %309 = vst [vmem:[#allocation2 + $0x40] sm:$0xff] %v291
        %310 = vst [vmem:[#allocation2 + $0x48] sm:$0xff] %v293
        %311 = vst [vmem:[#allocation2 + $0x50] sm:$0xff] %v297
        %312 = vst [vmem:[#allocation2 + $0x58] sm:$0xff] %v299
        %313 = vst [vmem:[%s162] sm:$0xff] 0.0
        %314 = vst [vmem:[%s162 + $0x8] sm:$0xff] 0.0
        %vm315 = vcmask 261120
        %316 = vst.msk [vmem:[%s162 + $0x10] sm:$0xff] %vm315, 0.0
        %317 = vst [vmem:[%s162 + $0x18] sm:$0xff] 0.0
        %318 = vst [vmem:[%s162 + $0x20] sm:$0xff] 0.0
        %319 = vst.msk [vmem:[%s162 + $0x28] sm:$0xff] %vm315, 0.0
        %v320 = vld [vmem:[#allocation2 + $0x20] sm:$0xff]
        %v321 = vld [vmem:[#allocation2 + $0x30] sm:$0xff]
        %v322 = vld [vmem:[#allocation2 + $0x40] sm:$0xff]
        %v323 = vld [vmem:[#allocation2 + $0x50] sm:$0xff]
        %326 = vrot.lane.b32.xlu0 %v322, 112
        %v327 = vpop.permute.xlu0 %326
        %328 = vrot.lane.b32.xlu0 %v323, 112
        %v329 = vpop.permute.xlu0 %328
        %v332 = vadd.f32 %v320, %v327
        %v333 = vadd.f32 %v321, %v329
        %v334 = vxor.u32 %v332, 2147483648
        %v335 = vxor.u32 %v333, 2147483648
        %v336 = vmul.f32 %v334, 1.442695
        %v337 = vpow.pop %v336
        %v338 = vmul.f32 %v335, 1.442695
        %v339 = vpow.pop %v338
        %v340 = vadd.f32 %v337, 1.0
        %v341 = vadd.f32 %v339, 1.0
        %v342 = vrcp.pop %v340
        %v343 = vmul.f32 1.0, %v342
        %v344 = vrcp.pop %v341
        %v345 = vmul.f32 1.0, %v344
        %v346 = vmul.f32 %v332, %v343
        %v347 = vmul.f32 %v333, %v345
        %350 = vrot.lane.b32.xlu0 %v346, 1
        %v351 = vpop.permute.xlu0 %350
        %352 = vrot.lane.b32.xlu0 %v347, 1
        %v353 = vpop.permute.xlu0 %352
        %vm356 = vcmask 138248
        %357 = vst.msk [vmem:[%s162] sm:$0xff] %vm356, %v351
        %358 = vst.msk [vmem:[%s162 + $0x18] sm:$0xff] %vm356, %v353
        %v359 = vld [vmem:[#allocation2 + $0x20] sm:$0xff]
        %v360 = vld [vmem:[#allocation2 + $0x30] sm:$0xff]
        %v361 = vld [vmem:[#allocation2] sm:$0xff]
        %v362 = vld [vmem:[#allocation2 + $0x10] sm:$0xff]
        %365 = vrot.lane.b32.xlu0 %v361, 16
        %v366 = vpop.permute.xlu0 %365
        %367 = vrot.lane.b32.xlu0 %v362, 16
        %v368 = vpop.permute.xlu0 %367
        %v371 = vadd.f32 %v359, %v366
        %v372 = vadd.f32 %v360, %v368
        %v373 = vld [vmem:[#allocation2 + $0x40] sm:$0xff]
        %v374 = vld [vmem:[#allocation2 + $0x50] sm:$0xff]
        %377 = vrot.lane.b32.xlu0 %v373, 112
        %v378 = vpop.permute.xlu0 %377
        %379 = vrot.lane.b32.xlu0 %v374, 112
        %v380 = vpop.permute.xlu0 %379
        %v383 = vadd.f32 %v371, %v378
        %v384 = vadd.f32 %v372, %v380
        %v385 = vxor.u32 %v383, 2147483648
        %v386 = vxor.u32 %v384, 2147483648
        %v387 = vmul.f32 %v385, 1.442695
        %v388 = vpow.pop %v387
        %v389 = vmul.f32 %v386, 1.442695
        %v390 = vpow.pop %v389
        %v391 = vadd.f32 %v388, 1.0
        %v392 = vadd.f32 %v390, 1.0
        %v393 = vrcp.pop %v391
        %v394 = vmul.f32 1.0, %v393
        %v395 = vrcp.pop %v392
        %v396 = vmul.f32 1.0, %v395
        %v397 = vmul.f32 %v383, %v394
        %v398 = vmul.f32 %v384, %v396
        %401 = vrot.lane.b32.xlu0 %v397, 3
        %v402 = vpop.permute.xlu0 %401
        %403 = vrot.lane.b32.xlu0 %v398, 3
        %v404 = vpop.permute.xlu0 %403
        %vm407 = vcmask 285848
        %408 = vst.msk [vmem:[%s162] sm:$0xff] %vm407, %v402
        %409 = vst.msk [vmem:[%s162 + $0x18] sm:$0xff] %vm407, %v404
        %v410 = vld [vmem:[#allocation2 + $0x20] sm:$0xff]
        %v411 = vld [vmem:[#allocation2 + $0x30] sm:$0xff]
        %v412 = vld [vmem:[#allocation2] sm:$0xff]
        %v413 = vld [vmem:[#allocation2 + $0x10] sm:$0xff]
        %416 = vrot.lane.b32.xlu0 %v412, 16
        %v417 = vpop.permute.xlu0 %416
        %418 = vrot.lane.b32.xlu0 %v413, 16
        %v419 = vpop.permute.xlu0 %418
        %v422 = vadd.f32 %v410, %v417
        %v423 = vadd.f32 %v411, %v419
        %v424 = vld [vmem:[#allocation2 + $0x40] sm:$0xff]
        %v425 = vld [vmem:[#allocation2 + $0x50] sm:$0xff]
        %428 = vrot.lane.b32.xlu0 %v424, 112
        %v429 = vpop.permute.xlu0 %428
        %430 = vrot.lane.b32.xlu0 %v425, 112
        %v431 = vpop.permute.xlu0 %430
        %v434 = vadd.f32 %v422, %v429
        %v435 = vadd.f32 %v423, %v431
        %v436 = vxor.u32 %v434, 2147483648
        %v437 = vxor.u32 %v435, 2147483648
        %v438 = vmul.f32 %v436, 1.442695
        %v439 = vpow.pop %v438
        %v440 = vmul.f32 %v437, 1.442695
        %v441 = vpow.pop %v440
        %v442 = vadd.f32 %v439, 1.0
        %v443 = vadd.f32 %v441, 1.0
        %v444 = vrcp.pop %v442
        %v445 = vmul.f32 1.0, %v444
        %v446 = vrcp.pop %v443
        %v447 = vmul.f32 1.0, %v446
        %v448 = vmul.f32 %v434, %v445
        %v449 = vmul.f32 %v435, %v447
        %452 = vrot.lane.b32.xlu0 %v448, 5
        %v453 = vpop.permute.xlu0 %452
        %454 = vrot.lane.b32.xlu0 %v449, 5
        %v455 = vpop.permute.xlu0 %454
        %vm458 = vcmask 433448
        %459 = vst.msk [vmem:[%s162] sm:$0xff] %vm458, %v453
        %460 = vst.msk [vmem:[%s162 + $0x18] sm:$0xff] %vm458, %v455
        %v461 = vld [vmem:[#allocation2 + $0x20] sm:$0xff]
        %v462 = vld [vmem:[#allocation2 + $0x30] sm:$0xff]
        %v463 = vld [vmem:[#allocation2] sm:$0xff]
        %v464 = vld [vmem:[#allocation2 + $0x10] sm:$0xff]
        %467 = vrot.lane.b32.xlu0 %v463, 16
        %v468 = vpop.permute.xlu0 %467
        %469 = vrot.lane.b32.xlu0 %v464, 16
        %v470 = vpop.permute.xlu0 %469
        %v473 = vadd.f32 %v461, %v468
        %v474 = vadd.f32 %v462, %v470
        %v475 = vld [vmem:[#allocation2 + $0x40] sm:$0xff]
        %v476 = vld [vmem:[#allocation2 + $0x50] sm:$0xff]
        %479 = vrot.lane.b32.xlu0 %v475, 112
        %v480 = vpop.permute.xlu0 %479
        %481 = vrot.lane.b32.xlu0 %v476, 112
        %v482 = vpop.permute.xlu0 %481
        %v485 = vadd.f32 %v473, %v480
        %v486 = vadd.f32 %v474, %v482
        %v487 = vxor.u32 %v485, 2147483648
        %v488 = vxor.u32 %v486, 2147483648
        %v489 = vmul.f32 %v487, 1.442695
        %v490 = vpow.pop %v489
        %v491 = vmul.f32 %v488, 1.442695
        %v492 = vpow.pop %v491
        %v493 = vadd.f32 %v490, 1.0
        %v494 = vadd.f32 %v492, 1.0
        %v495 = vrcp.pop %v493
        %v496 = vmul.f32 1.0, %v495
        %v497 = vrcp.pop %v494
        %v498 = vmul.f32 1.0, %v497
        %v499 = vmul.f32 %v485, %v496
        %v500 = vmul.f32 %v486, %v498
        %503 = vrot.lane.b32.xlu0 %v499, 7
        %v504 = vpop.permute.xlu0 %503
        %505 = vrot.lane.b32.xlu0 %v500, 7
        %v506 = vpop.permute.xlu0 %505
        %vm509 = vcmask 581048
        %510 = vst.msk [vmem:[%s162] sm:$0xff] %vm509, %v504
        %511 = vst.msk [vmem:[%s162 + $0x18] sm:$0xff] %vm509, %v506
        %v512 = vld [vmem:[#allocation2 + $0x20] sm:$0xff]
        %v513 = vld [vmem:[#allocation2 + $0x30] sm:$0xff]
        %v514 = vld [vmem:[#allocation2] sm:$0xff]
        %v515 = vld [vmem:[#allocation2 + $0x10] sm:$0xff]
        %518 = vrot.lane.b32.xlu0 %v514, 16
        %v519 = vpop.permute.xlu0 %518
        %520 = vrot.lane.b32.xlu0 %v515, 16
        %v521 = vpop.permute.xlu0 %520
        %v524 = vadd.f32 %v512, %v519
        %v525 = vadd.f32 %v513, %v521
        %v526 = vld [vmem:[#allocation2 + $0x40] sm:$0xff]
        %v527 = vld [vmem:[#allocation2 + $0x50] sm:$0xff]
        %530 = vrot.lane.b32.xlu0 %v526, 112
        %v531 = vpop.permute.xlu0 %530
        %532 = vrot.lane.b32.xlu0 %v527, 112
        %v533 = vpop.permute.xlu0 %532
        %v536 = vadd.f32 %v524, %v531
        %v537 = vadd.f32 %v525, %v533
        %v538 = vxor.u32 %v536, 2147483648
        %v539 = vxor.u32 %v537, 2147483648
        %v540 = vmul.f32 %v538, 1.442695
        %v541 = vpow.pop %v540
        %v542 = vmul.f32 %v539, 1.442695
        %v543 = vpow.pop %v542
        %v544 = vadd.f32 %v541, 1.0
        %v545 = vadd.f32 %v543, 1.0
        %v546 = vrcp.pop %v544
        %v547 = vmul.f32 1.0, %v546
        %v548 = vrcp.pop %v545
        %v549 = vmul.f32 1.0, %v548
        %v550 = vmul.f32 %v536, %v547
        %v551 = vmul.f32 %v537, %v549
        %554 = vrot.lane.b32.xlu0 %v550, 9
        %v555 = vpop.permute.xlu0 %554
        %556 = vrot.lane.b32.xlu0 %v551, 9
        %v557 = vpop.permute.xlu0 %556
        %vm560 = vcmask 728648
        %561 = vst.msk [vmem:[%s162] sm:$0xff] %vm560, %v555
        %562 = vst.msk [vmem:[%s162 + $0x18] sm:$0xff] %vm560, %v557
        %v563 = vld [vmem:[#allocation2 + $0x20] sm:$0xff]
        %v564 = vld [vmem:[#allocation2 + $0x30] sm:$0xff]
        %v565 = vld [vmem:[#allocation2] sm:$0xff]
        %v566 = vld [vmem:[#allocation2 + $0x10] sm:$0xff]
        %569 = vrot.lane.b32.xlu0 %v565, 16
        %v570 = vpop.permute.xlu0 %569
        %571 = vrot.lane.b32.xlu0 %v566, 16
        %v572 = vpop.permute.xlu0 %571
        %v575 = vadd.f32 %v563, %v570
        %v576 = vadd.f32 %v564, %v572
        %v577 = vld [vmem:[#allocation2 + $0x40] sm:$0xff]
        %v578 = vld [vmem:[#allocation2 + $0x50] sm:$0xff]
        %581 = vrot.lane.b32.xlu0 %v577, 112
        %v582 = vpop.permute.xlu0 %581
        %583 = vrot.lane.b32.xlu0 %v578, 112
        %v584 = vpop.permute.xlu0 %583
        %v587 = vadd.f32 %v575, %v582
        %v588 = vadd.f32 %v576, %v584
        %v589 = vxor.u32 %v587, 2147483648
        %v590 = vxor.u32 %v588, 2147483648
        %v591 = vmul.f32 %v589, 1.442695
        %v592 = vpow.pop %v591
        %v593 = vmul.f32 %v590, 1.442695
        %v594 = vpow.pop %v593
        %v595 = vadd.f32 %v592, 1.0
        %v596 = vadd.f32 %v594, 1.0
        %v597 = vrcp.pop %v595
        %v598 = vmul.f32 1.0, %v597
        %v599 = vrcp.pop %v596
        %v600 = vmul.f32 1.0, %v599
        %v601 = vmul.f32 %v587, %v598
        %v602 = vmul.f32 %v588, %v600
        %605 = vrot.lane.b32.xlu0 %v601, 11
        %v606 = vpop.permute.xlu0 %605
        %607 = vrot.lane.b32.xlu0 %v602, 11
        %v608 = vpop.permute.xlu0 %607
        %vm611 = vcmask 876248
        %612 = vst.msk [vmem:[%s162] sm:$0xff] %vm611, %v606
        %613 = vst.msk [vmem:[%s162 + $0x18] sm:$0xff] %vm611, %v608
        %v614 = vld [vmem:[#allocation2 + $0x20] sm:$0xff]
        %v615 = vld [vmem:[#allocation2 + $0x30] sm:$0xff]
        %v616 = vld [vmem:[#allocation2] sm:$0xff]
        %v617 = vld [vmem:[#allocation2 + $0x10] sm:$0xff]
        %620 = vrot.lane.b32.xlu0 %v616, 16
        %v621 = vpop.permute.xlu0 %620
        %622 = vrot.lane.b32.xlu0 %v617, 16
        %v623 = vpop.permute.xlu0 %622
        %v626 = vadd.f32 %v614, %v621
        %v627 = vadd.f32 %v615, %v623
        %v628 = vld [vmem:[#allocation2 + $0x40] sm:$0xff]
        %v629 = vld [vmem:[#allocation2 + $0x50] sm:$0xff]
        %632 = vrot.lane.b32.xlu0 %v628, 112
        %v633 = vpop.permute.xlu0 %632
        %634 = vrot.lane.b32.xlu0 %v629, 112
        %v635 = vpop.permute.xlu0 %634
        %v638 = vadd.f32 %v626, %v633
        %v639 = vadd.f32 %v627, %v635
        %v640 = vxor.u32 %v638, 2147483648
        %v641 = vxor.u32 %v639, 2147483648
        %v642 = vmul.f32 %v640, 1.442695
        %v643 = vpow.pop %v642
        %v644 = vmul.f32 %v641, 1.442695
        %v645 = vpow.pop %v644
        %v646 = vadd.f32 %v643, 1.0
        %v647 = vadd.f32 %v645, 1.0
        %v648 = vrcp.pop %v646
        %v649 = vmul.f32 1.0, %v648
        %v650 = vrcp.pop %v647
        %v651 = vmul.f32 1.0, %v650
        %v652 = vmul.f32 %v638, %v649
        %v653 = vmul.f32 %v639, %v651
        %656 = vrot.lane.b32.xlu0 %v652, 13
        %v657 = vpop.permute.xlu0 %656
        %658 = vrot.lane.b32.xlu0 %v653, 13
        %v659 = vpop.permute.xlu0 %658
        %vm662 = vcmask 1023848
        %663 = vst.msk [vmem:[%s162] sm:$0xff] %vm662, %v657
        %664 = vst.msk [vmem:[%s162 + $0x18] sm:$0xff] %vm662, %v659
        %v665 = vld [vmem:[#allocation2 + $0x20] sm:$0xff]
        %v666 = vld [vmem:[#allocation2 + $0x30] sm:$0xff]
        %v667 = vld [vmem:[#allocation2] sm:$0xff]
        %v668 = vld [vmem:[#allocation2 + $0x10] sm:$0xff]
        %671 = vrot.lane.b32.xlu0 %v667, 16
        %v672 = vpop.permute.xlu0 %671
        %673 = vrot.lane.b32.xlu0 %v668, 16
        %v674 = vpop.permute.xlu0 %673
        %v677 = vadd.f32 %v665, %v672
        %v678 = vadd.f32 %v666, %v674
        %v679 = vld [vmem:[#allocation2 + $0x48] sm:$0xff]
        %v680 = vld [vmem:[#allocation2 + $0x58] sm:$0xff]
        %683 = vrot.lane.b32.xlu0 %v679, 112
        %v684 = vpop.permute.xlu0 %683
        %685 = vrot.lane.b32.xlu0 %v680, 112
        %v686 = vpop.permute.xlu0 %685
        %v689 = vadd.f32 %v677, %v684
        %v690 = vadd.f32 %v678, %v686
        %v691 = vxor.u32 %v689, 2147483648
        %v692 = vxor.u32 %v690, 2147483648
        %v693 = vmul.f32 %v691, 1.442695
        %v694 = vpow.pop %v693
        %v695 = vmul.f32 %v692, 1.442695
        %v696 = vpow.pop %v695
        %v697 = vadd.f32 %v694, 1.0
        %v698 = vadd.f32 %v696, 1.0
        %v699 = vrcp.pop %v697
        %v700 = vmul.f32 1.0, %v699
        %v701 = vrcp.pop %v698
        %v702 = vmul.f32 1.0, %v701
        %v703 = vmul.f32 %v689, %v700
        %v704 = vmul.f32 %v690, %v702
        %707 = vrot.lane.b32.xlu0 %v703, 15
        %v708 = vpop.permute.xlu0 %707
        %709 = vrot.lane.b32.xlu0 %v704, 15
        %v710 = vpop.permute.xlu0 %709
        %vm713 = vcmask 1048568
        %714 = vst.msk [vmem:[%s162] sm:$0xff] %vm713, %v708
        %vm715 = vcmask 121856
        %716 = vst.msk [vmem:[%s162 + $0x8] sm:$0xff] %vm715, %v708
        %717 = vst.msk [vmem:[%s162 + $0x18] sm:$0xff] %vm713, %v710
        %718 = vst.msk [vmem:[%s162 + $0x20] sm:$0xff] %vm715, %v710
        %v719 = vld [vmem:[#allocation2 + $0x28] sm:$0xff]
        %v720 = vld [vmem:[#allocation2 + $0x38] sm:$0xff]
        %v721 = vld [vmem:[#allocation2] sm:$0xff]
        %v722 = vld [vmem:[#allocation2 + $0x10] sm:$0xff]
        %725 = vrot.lane.b32.xlu0 %v721, 16
        %v726 = vpop.permute.xlu0 %725
        %727 = vrot.lane.b32.xlu0 %v722, 16
        %v728 = vpop.permute.xlu0 %727
        %v731 = vadd.f32 %v719, %v726
        %v732 = vadd.f32 %v720, %v728
        %v733 = vld [vmem:[#allocation2 + $0x48] sm:$0xff]
        %v734 = vld [vmem:[#allocation2 + $0x58] sm:$0xff]
        %737 = vrot.lane.b32.xlu0 %v733, 112
        %v738 = vpop.permute.xlu0 %737
        %739 = vrot.lane.b32.xlu0 %v734, 112
        %v740 = vpop.permute.xlu0 %739
        %v743 = vadd.f32 %v731, %v738
        %v744 = vadd.f32 %v732, %v740
        %v745 = vxor.u32 %v743, 2147483648
        %v746 = vxor.u32 %v744, 2147483648
        %v747 = vmul.f32 %v745, 1.442695
        %v748 = vpow.pop %v747
        %v749 = vmul.f32 %v746, 1.442695
        %v750 = vpow.pop %v749
        %v751 = vadd.f32 %v748, 1.0
        %v752 = vadd.f32 %v750, 1.0
        %v753 = vrcp.pop %v751
        %v754 = vmul.f32 1.0, %v753
        %v755 = vrcp.pop %v752
        %v756 = vmul.f32 1.0, %v755
        %v757 = vmul.f32 %v743, %v754
        %v758 = vmul.f32 %v744, %v756
        %761 = vrot.lane.b32.xlu0 %v757, 17
        %v762 = vpop.permute.xlu0 %761
        %763 = vrot.lane.b32.xlu0 %v758, 17
        %v764 = vpop.permute.xlu0 %763
        %vm767 = vcmask 269448
        %768 = vst.msk [vmem:[%s162 + $0x8] sm:$0xff] %vm767, %v762
        %769 = vst.msk [vmem:[%s162 + $0x20] sm:$0xff] %vm767, %v764
        %v770 = vld [vmem:[#allocation2 + $0x28] sm:$0xff]
        %v771 = vld [vmem:[#allocation2 + $0x38] sm:$0xff]
        %v772 = vld [vmem:[#allocation2 + $0x8] sm:$0xff]
        %v773 = vld [vmem:[#allocation2 + $0x18] sm:$0xff]
        %776 = vrot.lane.b32.xlu0 %v772, 16
        %v777 = vpop.permute.xlu0 %776
        %778 = vrot.lane.b32.xlu0 %v773, 16
        %v779 = vpop.permute.xlu0 %778
        %v782 = vadd.f32 %v770, %v777
        %v783 = vadd.f32 %v771, %v779
        %v784 = vld [vmem:[#allocation2 + $0x48] sm:$0xff]
        %v785 = vld [vmem:[#allocation2 + $0x58] sm:$0xff]
        %788 = vrot.lane.b32.xlu0 %v784, 112
        %v789 = vpop.permute.xlu0 %788
        %790 = vrot.lane.b32.xlu0 %v785, 112
        %v791 = vpop.permute.xlu0 %790
        %v794 = vadd.f32 %v782, %v789
        %v795 = vadd.f32 %v783, %v791
        %v796 = vxor.u32 %v794, 2147483648
        %v797 = vxor.u32 %v795, 2147483648
        %v798 = vmul.f32 %v796, 1.442695
        %v799 = vpow.pop %v798
        %v800 = vmul.f32 %v797, 1.442695
        %v801 = vpow.pop %v800
        %v802 = vadd.f32 %v799, 1.0
        %v803 = vadd.f32 %v801, 1.0
        %v804 = vrcp.pop %v802
        %v805 = vmul.f32 1.0, %v804
        %v806 = vrcp.pop %v803
        %v807 = vmul.f32 1.0, %v806
        %v808 = vmul.f32 %v794, %v805
        %v809 = vmul.f32 %v795, %v807
        %812 = vrot.lane.b32.xlu0 %v808, 19
        %v813 = vpop.permute.xlu0 %812
        %814 = vrot.lane.b32.xlu0 %v809, 19
        %v815 = vpop.permute.xlu0 %814
        %vm818 = vcmask 417048
        %819 = vst.msk [vmem:[%s162 + $0x8] sm:$0xff] %vm818, %v813
        %820 = vst.msk [vmem:[%s162 + $0x20] sm:$0xff] %vm818, %v815
        %v821 = vld [vmem:[#allocation2 + $0x28] sm:$0xff]
        %v822 = vld [vmem:[#allocation2 + $0x38] sm:$0xff]
        %v823 = vld [vmem:[#allocation2 + $0x8] sm:$0xff]
        %v824 = vld [vmem:[#allocation2 + $0x18] sm:$0xff]
        %827 = vrot.lane.b32.xlu0 %v823, 16
        %v828 = vpop.permute.xlu0 %827
        %829 = vrot.lane.b32.xlu0 %v824, 16
        %v830 = vpop.permute.xlu0 %829
        %v833 = vadd.f32 %v821, %v828
        %v834 = vadd.f32 %v822, %v830
        %v835 = vld [vmem:[#allocation2 + $0x48] sm:$0xff]
        %v836 = vld [vmem:[#allocation2 + $0x58] sm:$0xff]
        %839 = vrot.lane.b32.xlu0 %v835, 112
        %v840 = vpop.permute.xlu0 %839
        %841 = vrot.lane.b32.xlu0 %v836, 112
        %v842 = vpop.permute.xlu0 %841
        %v845 = vadd.f32 %v833, %v840
        %v846 = vadd.f32 %v834, %v842
        %v847 = vxor.u32 %v845, 2147483648
        %v848 = vxor.u32 %v846, 2147483648
        %v849 = vmul.f32 %v847, 1.442695
        %v850 = vpow.pop %v849
        %v851 = vmul.f32 %v848, 1.442695
        %v852 = vpow.pop %v851
        %v853 = vadd.f32 %v850, 1.0
        %v854 = vadd.f32 %v852, 1.0
        %v855 = vrcp.pop %v853
        %v856 = vmul.f32 1.0, %v855
        %v857 = vrcp.pop %v854
        %v858 = vmul.f32 1.0, %v857
        %v859 = vmul.f32 %v845, %v856
        %v860 = vmul.f32 %v846, %v858
        %863 = vrot.lane.b32.xlu0 %v859, 21
        %v864 = vpop.permute.xlu0 %863
        %865 = vrot.lane.b32.xlu0 %v860, 21
        %v866 = vpop.permute.xlu0 %865
        %vm869 = vcmask 564648
        %870 = vst.msk [vmem:[%s162 + $0x8] sm:$0xff] %vm869, %v864
        %871 = vst.msk [vmem:[%s162 + $0x20] sm:$0xff] %vm869, %v866
        %v872 = vld [vmem:[#allocation2 + $0x28] sm:$0xff]
        %v873 = vld [vmem:[#allocation2 + $0x38] sm:$0xff]
        %v874 = vld [vmem:[#allocation2 + $0x8] sm:$0xff]
        %v875 = vld [vmem:[#allocation2 + $0x18] sm:$0xff]
        %878 = vrot.lane.b32.xlu0 %v874, 16
        %v879 = vpop.permute.xlu0 %878
        %880 = vrot.lane.b32.xlu0 %v875, 16
        %v881 = vpop.permute.xlu0 %880
        %v884 = vadd.f32 %v872, %v879
        %v885 = vadd.f32 %v873, %v881
        %v886 = vld [vmem:[#allocation2 + $0x48] sm:$0xff]
        %v887 = vld [vmem:[#allocation2 + $0x58] sm:$0xff]
        %890 = vrot.lane.b32.xlu0 %v886, 112
        %v891 = vpop.permute.xlu0 %890
        %892 = vrot.lane.b32.xlu0 %v887, 112
        %v893 = vpop.permute.xlu0 %892
        %v896 = vadd.f32 %v884, %v891
        %v897 = vadd.f32 %v885, %v893
        %v898 = vxor.u32 %v896, 2147483648
        %v899 = vxor.u32 %v897, 2147483648
        %v900 = vmul.f32 %v898, 1.442695
        %v901 = vpow.pop %v900
        %v902 = vmul.f32 %v899, 1.442695
        %v903 = vpow.pop %v902
        %v904 = vadd.f32 %v901, 1.0
        %v905 = vadd.f32 %v903, 1.0
        %v906 = vrcp.pop %v904
        %v907 = vmul.f32 1.0, %v906
        %v908 = vrcp.pop %v905
        %v909 = vmul.f32 1.0, %v908
        %v910 = vmul.f32 %v896, %v907
        %v911 = vmul.f32 %v897, %v909
        %914 = vrot.lane.b32.xlu0 %v910, 23
        %v915 = vpop.permute.xlu0 %914
        %916 = vrot.lane.b32.xlu0 %v911, 23
        %v917 = vpop.permute.xlu0 %916
        %vm920 = vcmask 712248
        %921 = vst.msk [vmem:[%s162 + $0x8] sm:$0xff] %vm920, %v915
        %922 = vst.msk [vmem:[%s162 + $0x20] sm:$0xff] %vm920, %v917
        %v923 = vld [vmem:[#allocation2 + $0x28] sm:$0xff]
        %v924 = vld [vmem:[#allocation2 + $0x38] sm:$0xff]
        %v925 = vld [vmem:[#allocation2 + $0x8] sm:$0xff]
        %v926 = vld [vmem:[#allocation2 + $0x18] sm:$0xff]
        %929 = vrot.lane.b32.xlu0 %v925, 16
        %v930 = vpop.permute.xlu0 %929
        %931 = vrot.lane.b32.xlu0 %v926, 16
        %v932 = vpop.permute.xlu0 %931
        %v935 = vadd.f32 %v923, %v930
        %v936 = vadd.f32 %v924, %v932
        %v937 = vld [vmem:[#allocation2 + $0x48] sm:$0xff]
        %v938 = vld [vmem:[#allocation2 + $0x58] sm:$0xff]
        %941 = vrot.lane.b32.xlu0 %v937, 112
        %v942 = vpop.permute.xlu0 %941
        %943 = vrot.lane.b32.xlu0 %v938, 112
        %v944 = vpop.permute.xlu0 %943
        %v947 = vadd.f32 %v935, %v942
        %v948 = vadd.f32 %v936, %v944
        %v949 = vxor.u32 %v947, 2147483648
        %v950 = vxor.u32 %v948, 2147483648
        %v951 = vmul.f32 %v949, 1.442695
        %v952 = vpow.pop %v951
        %v953 = vmul.f32 %v950, 1.442695
        %v954 = vpow.pop %v953
        %v955 = vadd.f32 %v952, 1.0
        %v956 = vadd.f32 %v954, 1.0
        %v957 = vrcp.pop %v955
        %v958 = vmul.f32 1.0, %v957
        %v959 = vrcp.pop %v956
        %v960 = vmul.f32 1.0, %v959
        %v961 = vmul.f32 %v947, %v958
        %v962 = vmul.f32 %v948, %v960
        %965 = vrot.lane.b32.xlu0 %v961, 25
        %v966 = vpop.permute.xlu0 %965
        %967 = vrot.lane.b32.xlu0 %v962, 25
        %v968 = vpop.permute.xlu0 %967
        %vm971 = vcmask 859848
        %972 = vst.msk [vmem:[%s162 + $0x8] sm:$0xff] %vm971, %v966
        %973 = vst.msk [vmem:[%s162 + $0x20] sm:$0xff] %vm971, %v968
        %v974 = vld [vmem:[#allocation2 + $0x28] sm:$0xff]
        %v975 = vld [vmem:[#allocation2 + $0x38] sm:$0xff]
        %v976 = vld [vmem:[#allocation2 + $0x8] sm:$0xff]
        %v977 = vld [vmem:[#allocation2 + $0x18] sm:$0xff]
        %980 = vrot.lane.b32.xlu0 %v976, 16
        %v981 = vpop.permute.xlu0 %980
        %982 = vrot.lane.b32.xlu0 %v977, 16
        %v983 = vpop.permute.xlu0 %982
        %v986 = vadd.f32 %v974, %v981
        %v987 = vadd.f32 %v975, %v983
        %v988 = vld [vmem:[#allocation2 + $0x48] sm:$0xff]
        %v989 = vld [vmem:[#allocation2 + $0x58] sm:$0xff]
        %992 = vrot.lane.b32.xlu0 %v988, 112
        %v993 = vpop.permute.xlu0 %992
        %994 = vrot.lane.b32.xlu0 %v989, 112
        %v995 = vpop.permute.xlu0 %994
        %v998 = vadd.f32 %v986, %v993
        %v999 = vadd.f32 %v987, %v995
        %v1000 = vxor.u32 %v998, 2147483648
        %v1001 = vxor.u32 %v999, 2147483648
        %v1002 = vmul.f32 %v1000, 1.442695
        %v1003 = vpow.pop %v1002
        %v1004 = vmul.f32 %v1001, 1.442695
        %v1005 = vpow.pop %v1004
        %v1006 = vadd.f32 %v1003, 1.0
        %v1007 = vadd.f32 %v1005, 1.0
        %v1008 = vrcp.pop %v1006
        %v1009 = vmul.f32 1.0, %v1008
        %v1010 = vrcp.pop %v1007
        %v1011 = vmul.f32 1.0, %v1010
        %v1012 = vmul.f32 %v998, %v1009
        %v1013 = vmul.f32 %v999, %v1011
        %1016 = vrot.lane.b32.xlu0 %v1012, 27
        %v1017 = vpop.permute.xlu0 %1016
        %1018 = vrot.lane.b32.xlu0 %v1013, 27
        %v1019 = vpop.permute.xlu0 %1018
        %vm1022 = vcmask 1007448
        %1023 = vst.msk [vmem:[%s162 + $0x8] sm:$0xff] %vm1022, %v1017
        %1024 = vst.msk [vmem:[%s162 + $0x20] sm:$0xff] %vm1022, %v1019
        %v1025 = vld [vmem:[#allocation2 + $0x28] sm:$0xff]
        %v1026 = vld [vmem:[#allocation2 + $0x38] sm:$0xff]
        %v1027 = vld [vmem:[#allocation2 + $0x8] sm:$0xff]
        %v1028 = vld [vmem:[#allocation2 + $0x18] sm:$0xff]
        %1031 = vrot.lane.b32.xlu0 %v1027, 16
        %v1032 = vpop.permute.xlu0 %1031
        %1033 = vrot.lane.b32.xlu0 %v1028, 16
        %v1034 = vpop.permute.xlu0 %1033
        %v1037 = vadd.f32 %v1025, %v1032
        %v1038 = vadd.f32 %v1026, %v1034
        %v1039 = vld [vmem:[#allocation2 + $0x48] sm:$0xff]
        %v1040 = vld [vmem:[#allocation2 + $0x58] sm:$0xff]
        %1043 = vrot.lane.b32.xlu0 %v1039, 112
        %v1044 = vpop.permute.xlu0 %1043
        %1045 = vrot.lane.b32.xlu0 %v1040, 112
        %v1046 = vpop.permute.xlu0 %1045
        %v1049 = vadd.f32 %v1037, %v1044
        %v1050 = vadd.f32 %v1038, %v1046
        %v1051 = vxor.u32 %v1049, 2147483648
        %v1052 = vxor.u32 %v1050, 2147483648
        %v1053 = vmul.f32 %v1051, 1.442695
        %v1054 = vpow.pop %v1053
        %v1055 = vmul.f32 %v1052, 1.442695
        %v1056 = vpow.pop %v1055
        %v1057 = vadd.f32 %v1054, 1.0
        %v1058 = vadd.f32 %v1056, 1.0
        %v1059 = vrcp.pop %v1057
        %v1060 = vmul.f32 1.0, %v1059
        %v1061 = vrcp.pop %v1058
        %v1062 = vmul.f32 1.0, %v1061
        %v1063 = vmul.f32 %v1049, %v1060
        %v1064 = vmul.f32 %v1050, %v1062
        %1067 = vrot.lane.b32.xlu0 %v1063, 29
        %v1068 = vpop.permute.xlu0 %1067
        %1069 = vrot.lane.b32.xlu0 %v1064, 29
        %v1070 = vpop.permute.xlu0 %1069
        %vm1073 = vcmask 1048552
        %1074 = vst.msk [vmem:[%s162 + $0x8] sm:$0xff] %vm1073, %v1068
        %vm1075 = vcmask 105472
        %1076 = vst.msk [vmem:[%s162 + $0x10] sm:$0xff] %vm1075, %v1068
        %1077 = vst.msk [vmem:[%s162 + $0x20] sm:$0xff] %vm1073, %v1070
        %1078 = vst.msk [vmem:[%s162 + $0x28] sm:$0xff] %vm1075, %v1070
        %v1079 = vld [vmem:[#allocation2 + $0x28] sm:$0xff]
        %v1080 = vld [vmem:[#allocation2 + $0x38] sm:$0xff]
        %v1081 = vld [vmem:[#allocation2 + $0x8] sm:$0xff]
        %v1082 = vld [vmem:[#allocation2 + $0x18] sm:$0xff]
        %1085 = vrot.lane.b32.xlu0 %v1081, 16
        %v1086 = vpop.permute.xlu0 %1085
        %1087 = vrot.lane.b32.xlu0 %v1082, 16
        %v1088 = vpop.permute.xlu0 %1087
        %v1091 = vadd.f32 %v1079, %v1086
        %v1092 = vadd.f32 %v1080, %v1088
        %v1093 = vxor.u32 %v1091, 2147483648
        %v1094 = vxor.u32 %v1092, 2147483648
        %v1095 = vmul.f32 %v1093, 1.442695
        %v1096 = vpow.pop %v1095
        %v1097 = vmul.f32 %v1094, 1.442695
        %v1098 = vpow.pop %v1097
        %v1099 = vadd.f32 %v1096, 1.0
        %v1100 = vadd.f32 %v1098, 1.0
        %v1101 = vrcp.pop %v1099
        %v1102 = vmul.f32 1.0, %v1101
        %v1103 = vrcp.pop %v1100
        %v1104 = vmul.f32 1.0, %v1103
        %v1105 = vmul.f32 %v1091, %v1102
        %v1106 = vmul.f32 %v1092, %v1104
        %1109 = vrot.lane.b32.xlu0 %v1105, 31
        %v1110 = vpop.permute.xlu0 %1109
        %1111 = vrot.lane.b32.xlu0 %v1106, 31
        %v1112 = vpop.permute.xlu0 %1111
        %vm1115 = vcmask 253048
        %1116 = vst.msk [vmem:[%s162 + $0x10] sm:$0xff] %vm1115, %v1110
        %1117 = vst.msk [vmem:[%s162 + $0x28] sm:$0xff] %vm1115, %v1112
        %s1118 = sand.u32 %s74, 1
        %s1119 = scalar_lea.sflag [#allocation5], %s1118
        %s1120 = sand.u32 %s74, 1
        %s1121 = smul.addr %s1120, 48
        %s1122 = scalar_lea.vmem [#allocation6], %s1121
        // Predicated region
        $region33: #{tpu_custom_call.1} parent=27 // pred_check
          %p1123 = pneg %p84
        $region34: #{tpu_custom_call.1} parent=27 // pred_check_branch
          %1125 = sbr.rel (%p1123) target = $region36
        $region35: #{tpu_custom_call.1} parent=27 // pred_region
          %s1126 = smul.u32 2, %s19
          %s1128 = ssub.s32 768, 768
          %1129 = vsyncadd %s1119, %s1128
          %s1130 = smul.addr %s1126, 3
          %s1131 = smul.addr %s1130, 128
          %s1132 = scalar_lea.hbm %s2, %s1131
          %s1133 = sshll.u32 %s1122, 4
          %s1134 = int_to_ptr.vmem [resolvable:$true] %s1133
          %1139 = dma.vmem_to_hbm [thread:$0]  %s1134, 768, %s1132, %s1119, 384, 384, 24
        $region36: #{tpu_custom_call.1} parent=27 // pred_fallthru
          _
      $region28: #{tpu_custom_call.1} parent=5 // pred_fallthru
        _
      %p1140 = scmp.le.s32.totalorder 2, %s14
      // Predicated region
      $region37: #{tpu_custom_call.1} parent=5 // pred_check
        %p1141 = pneg %p1140
      $region38: #{tpu_custom_call.1} parent=5 // pred_check_branch
        %1143 = sbr.rel (%p1141) target = $region40
      $region39: #{tpu_custom_call.1} parent=5 // pred_region
        %s1144 = ssub.s32 %s14, 2
        // Predicated region
        $region41: #{tpu_custom_call.1} parent=39 // pred_check
          %p1145 = pneg %p90
        $region42: #{tpu_custom_call.1} parent=39 // pred_check_branch
          %1147 = sbr.rel (%p1145) target = $region44
        $region43: #{tpu_custom_call.1} parent=39 // pred_region
          %s1148 = sand.u32 %s75, 1
          %s1149 = scalar_lea.sflag [#allocation5], %s1148
          %s1150 = sand.u32 %s75, 1
          %s1151 = smul.addr %s1150, 48
          %s1152 = scalar_lea.vmem [#allocation6], %s1151
          %1153 = dma.done %s1149, 768
        $region44: #{tpu_custom_call.1} parent=39 // pred_fallthru
          _
      $region40: #{tpu_custom_call.1} parent=5 // pred_fallthru
        _
    $region6: #{tpu_custom_call.1} parent=1 // loop_footer
      %s18 = sadd.s32 1, %s14
    $region7: #{tpu_custom_call.1} parent=1 // loop_footer_branch
      %13 = sbr.rel target = $region3
    $region8: #{tpu_custom_call.1} parent=1 // loop_exit
      _
    %1154 = vsyncpa [#allocation4], 1
    %s1155 = scalar_lea.sflag [#allocation4], 1
    %1156 = vsyncpa %s1155, 1
    %1157 = vsyncpa [#allocation5], 1
    %s1158 = scalar_lea.sflag [#allocation5], 1
    %1159 = vsyncpa %s1158, 1

</llo_original>
